<compile_context>
chip_gen: v5e
topology: v5e:2x2
jax: 0.10.0
libtpu: 0.0.40
codegen_flags: <defaults>
</compile_context>

<pallas_src>
import functools
import math

import jax
import jax.numpy as jnp
from jax.experimental import pallas as pl
from jax.experimental.pallas import tpu as pltpu


def _mlp_kernel(n_layers, compute_dtype, st_ref, stp1_ref, *refs):
    """refs = (w1_top, w1_bot, b1, w2, b2, ..., wn, bn, out_ref)."""
    out_ref = refs[-1]
    wb = refs[:-1]

    # Layer 0: split-weight formulation, equivalent to cat([st, stp1], 1) @ W1 + b1,
    # without the lane-axis concat (keeps both inputs lane-aligned as loaded).
    x = (
        jnp.dot(st_ref[...].astype(compute_dtype), wb[0][...],
                preferred_element_type=jnp.float32)
        + jnp.dot(stp1_ref[...].astype(compute_dtype), wb[1][...],
                  preferred_element_type=jnp.float32)
        + wb[2][...]
    )
    # Remaining layers; ReLU applies to hidden-layer outputs only (not the last).
    for layer in range(1, n_layers):
        x = jnp.maximum(x, 0.0)
        w = wb[1 + 2 * layer][...]
        b = wb[2 + 2 * layer][...]
        x = jnp.dot(x.astype(compute_dtype), w,
                    preferred_element_type=jnp.float32) + b
    out_ref[...] = x.astype(out_ref.dtype)


def approximator_forward(st, stp1, params, *, bm=None, use_bf16=False):
    """params: list of (W, b) with W shaped (in_features, out_features), b shaped (1, out)."""
    B, F = st.shape
    assert stp1.shape == (B, F)
    n_layers = len(params)
    w1, b1 = params[0]
    assert w1.shape[0] == 2 * F, "first layer must take the concatenated pair"
    out_dim = params[-1][0].shape[1]

    # ---- batch tiling: biggest tile that makes sense -------------------------
    if bm is None:
        if B <= 256:
            bm = B                                    # one grid step: latency-bound regime
        else:
            # >= 2 grid steps so the batch axis can shard across v7x's 2 TensorCores,
            # capped at 512 rows per tile (VMEM is not a constraint at these widths).
            bm = min(512, ((math.ceil(B / 2) + 7) // 8) * 8)
    if bm < B and bm % 8 != 0:                        # (8, 128) sublane constraint
        bm = max(8, (bm // 8) * 8)
    grid_b = math.ceil(B / bm)
    B_pad = grid_b * bm
    if B_pad != B:                                    # ragged batch: zero-pad rows
        pad = B_pad - B
        st = jnp.pad(st, ((0, pad), (0, 0)))
        stp1 = jnp.pad(stp1, ((0, pad), (0, 0)))

    # ---- parameter prep (split first-layer weight; optional bf16 matmuls) ----
    compute_dtype = jnp.bfloat16 if use_bf16 else jnp.float32
    w1_top = w1[:F].astype(compute_dtype)             # (F, H)
    w1_bot = w1[F:].astype(compute_dtype)             # (F, H)
    flat_params = [w1_top, w1_bot, b1]
    for w, b in params[1:]:
        flat_params += [w.astype(compute_dtype), b]

    # ---- specs ----------------------------------------------------------------
    in_specs = [
        pl.BlockSpec((bm, F), lambda i: (i, 0)),      # st batch tile
        pl.BlockSpec((bm, F), lambda i: (i, 0)),      # stp1 batch tile
    ]
    # Weights / biases: whole arrays resident in VMEM, copied in once
    # (no per-grid-step double buffering or DMA descriptors).
    in_specs += [pl.BlockSpec(memory_space=pltpu.MemorySpace.VMEM)] * len(flat_params)

    out_specs = pl.BlockSpec((bm, out_dim), lambda i: (i, 0))

    # ---- advisory cost estimate for the XLA scheduler -------------------------
    flops = int(sum(2 * B_pad * w.shape[0] * w.shape[1] for w, _ in params))
    bytes_accessed = int(
        st.size * st.dtype.itemsize
        + stp1.size * stp1.dtype.itemsize
        + sum(a.size * a.dtype.itemsize for a in flat_params)
        + B_pad * out_dim * 4
    )

    kernel = functools.partial(_mlp_kernel, n_layers, compute_dtype)

    out = pl.pallas_call(
        kernel,
        grid=(grid_b,),
        in_specs=in_specs,
        out_specs=out_specs,
        out_shape=jax.ShapeDtypeStruct((B_pad, out_dim), st.dtype),
        compiler_params=pltpu.CompilerParams(
            dimension_semantics=("parallel",),        # batch axis shards across TCs (v7x)
        ),
        cost_estimate=pl.CostEstimate(
            flops=flops, transcendentals=0, bytes_accessed=bytes_accessed),
    )(st, stp1, *flat_params)

    return out[:B] if B_pad != B else out


def init_mlp_params(key, input_dim, hidden_dim, output_dim, hidden_depth):
    """Deterministic PyTorch-nn.Linear-style init. Weights stored as (in, out)."""
    if hidden_depth == 0:
        dims = [(input_dim, output_dim)]
    else:
        dims = [(input_dim, hidden_dim)]
        dims += [(hidden_dim, hidden_dim)] * (hidden_depth - 1)
        dims += [(hidden_dim, output_dim)]

    params = []
    for fan_in, fan_out in dims:
        key, kw, kb = jax.random.split(key, 3)
        bound = 1.0 / jnp.sqrt(jnp.float32(fan_in))
        w = jax.random.uniform(kw, (fan_in, fan_out), jnp.float32, -bound, bound)
        b = jax.random.uniform(kb, (1, fan_out), jnp.float32, -bound, bound)
        params.append((w, b))
    return params


def reference_forward(st, stp1, params):
    x = jnp.concatenate([st, stp1], axis=1)
    n = len(params)
    for i, (w, b) in enumerate(params):
        x = x @ w + b
        if i < n - 1:
            x = jnp.maximum(x, 0.0)
    return x


if __name__ == "__main__":
    fusion_dim = 16
    hidden_dim = 32
    hidden_depth = 2
    latent_dim = 8
    batch = 16

    key = jax.random.PRNGKey(0)
    k_st, k_stp1, k_params, k_st2, k_stp12 = jax.random.split(key, 5)

    st = jax.random.normal(k_st, (batch, fusion_dim), jnp.float32)
    stp1 = jax.random.normal(k_stp1, (batch, fusion_dim), jnp.float32)
    params = init_mlp_params(
        k_params, fusion_dim * 2, hidden_dim, latent_dim, hidden_depth
    )

    # Default path: whole batch in one grid step (lane-dense single output store).
    out = jax.block_until_ready(approximator_forward(st, stp1, params))
    ref = reference_forward(st, stp1, params)
    assert out.shape == (batch, latent_dim)
    assert jnp.allclose(out, ref, atol=1e-5, rtol=1e-5), "mismatch vs JAX reference"

    # Also exercise the multi-step grid + ragged-batch (padding) path.
    batch2 = 20
    st2 = jax.random.normal(k_st2, (batch2, fusion_dim), jnp.float32)
    stp12 = jax.random.normal(k_stp12, (batch2, fusion_dim), jnp.float32)
    out2 = jax.block_until_ready(approximator_forward(st2, stp12, params, bm=8))
    ref2 = reference_forward(st2, stp12, params)
    assert out2.shape == (batch2, latent_dim)
    assert jnp.allclose(out2, ref2, atol=1e-5, rtol=1e-5), "mismatch on tiled/padded path"

    print("KERNEL_OK")
</pallas_src>

<mosaic_0001>
module attributes {stable_mosaic.version = 11 : i64} {
  func.func @_mlp_kernel(%arg0: i32, %arg1: memref<16x16xf32, #tpu.memory_space<vmem>>, %arg2: memref<16x16xf32, #tpu.memory_space<vmem>>, %arg3: memref<16x32xf32, #tpu.memory_space<vmem>>, %arg4: memref<16x32xf32, #tpu.memory_space<vmem>>, %arg5: memref<1x32xf32, #tpu.memory_space<vmem>>, %arg6: memref<32x32xf32, #tpu.memory_space<vmem>>, %arg7: memref<1x32xf32, #tpu.memory_space<vmem>>, %arg8: memref<32x8xf32, #tpu.memory_space<vmem>>, %arg9: memref<1x8xf32, #tpu.memory_space<vmem>>, %arg10: memref<16x8xf32, #tpu.memory_space<vmem>>) attributes {dimension_semantics = [#tpu.dimension_semantics<parallel>], iteration_bounds = array<i64: 1>, scalar_prefetch = 0 : i64, scratch_operands = 0 : i64, tpu.core_type = #tpu.core_type<tc>, window_params = [{transform_indices = @transform_0, window_bounds = array<i64: 16, 16>}, {transform_indices = @transform_1, window_bounds = array<i64: 16, 16>}, {pipeline_mode = #tpu.pipeline_mode<synchronous>, transform_indices = @transform_2, window_bounds = array<i64: 16, 32>}, {pipeline_mode = #tpu.pipeline_mode<synchronous>, transform_indices = @transform_3, window_bounds = array<i64: 16, 32>}, {pipeline_mode = #tpu.pipeline_mode<synchronous>, transform_indices = @transform_4, window_bounds = array<i64: 1, 32>}, {pipeline_mode = #tpu.pipeline_mode<synchronous>, transform_indices = @transform_5, window_bounds = array<i64: 32, 32>}, {pipeline_mode = #tpu.pipeline_mode<synchronous>, transform_indices = @transform_6, window_bounds = array<i64: 1, 32>}, {pipeline_mode = #tpu.pipeline_mode<synchronous>, transform_indices = @transform_7, window_bounds = array<i64: 32, 8>}, {pipeline_mode = #tpu.pipeline_mode<synchronous>, transform_indices = @transform_8, window_bounds = array<i64: 1, 8>}, {transform_indices = @transform_9, window_bounds = array<i64: 16, 8>}]} {
    %c0 = arith.constant 0 : index
    %c0_0 = arith.constant 0 : index
    %0 = vector.load %arg1[%c0, %c0_0] : memref<16x16xf32, #tpu.memory_space<vmem>>, vector<16x16xf32>
    %c0_1 = arith.constant 0 : index
    %c0_2 = arith.constant 0 : index
    %1 = vector.load %arg3[%c0_1, %c0_2] : memref<16x32xf32, #tpu.memory_space<vmem>>, vector<16x32xf32>
    %cst = arith.constant dense<0.000000e+00> : vector<16x32xf32>
    %2 = tpu.matmul %0, %1, %cst {dimension_numbers = #tpu.dot_dimension_numbers<[1], [0], [0], [1], [0, 0, 1, 1], [], []>} : vector<16x16xf32>, vector<16x32xf32>, vector<16x32xf32> -> vector<16x32xf32>
    %c0_3 = arith.constant 0 : index
    %c0_4 = arith.constant 0 : index
    %3 = vector.load %arg2[%c0_3, %c0_4] : memref<16x16xf32, #tpu.memory_space<vmem>>, vector<16x16xf32>
    %c0_5 = arith.constant 0 : index
    %c0_6 = arith.constant 0 : index
    %4 = vector.load %arg4[%c0_5, %c0_6] : memref<16x32xf32, #tpu.memory_space<vmem>>, vector<16x32xf32>
    %cst_7 = arith.constant dense<0.000000e+00> : vector<16x32xf32>
    %5 = tpu.matmul %3, %4, %cst_7 {dimension_numbers = #tpu.dot_dimension_numbers<[1], [0], [0], [1], [0, 0, 1, 1], [], []>} : vector<16x16xf32>, vector<16x32xf32>, vector<16x32xf32> -> vector<16x32xf32>
    %6 = arith.addf %2, %5 : vector<16x32xf32>
    %c0_8 = arith.constant 0 : index
    %c0_9 = arith.constant 0 : index
    %7 = vector.load %arg5[%c0_8, %c0_9] : memref<1x32xf32, #tpu.memory_space<vmem>>, vector<1x32xf32>
    %8 = vector.broadcast %7 : vector<1x32xf32> to vector<16x32xf32>
    %9 = arith.addf %6, %8 : vector<16x32xf32>
    %cst_10 = arith.constant 0.000000e+00 : f32
    %10 = vector.broadcast %cst_10 : f32 to vector<16x32xf32>
    %11 = arith.maximumf %9, %10 : vector<16x32xf32>
    %c0_11 = arith.constant 0 : index
    %c0_12 = arith.constant 0 : index
    %12 = vector.load %arg6[%c0_11, %c0_12] : memref<32x32xf32, #tpu.memory_space<vmem>>, vector<32x32xf32>
    %c0_13 = arith.constant 0 : index
    %c0_14 = arith.constant 0 : index
    %13 = vector.load %arg7[%c0_13, %c0_14] : memref<1x32xf32, #tpu.memory_space<vmem>>, vector<1x32xf32>
    %cst_15 = arith.constant dense<0.000000e+00> : vector<16x32xf32>
    %14 = tpu.matmul %11, %12, %cst_15 {dimension_numbers = #tpu.dot_dimension_numbers<[1], [0], [0], [1], [0, 0, 1, 1], [], []>} : vector<16x32xf32>, vector<32x32xf32>, vector<16x32xf32> -> vector<16x32xf32>
    %15 = vector.broadcast %13 : vector<1x32xf32> to vector<16x32xf32>
    %16 = arith.addf %14, %15 : vector<16x32xf32>
    %cst_16 = arith.constant 0.000000e+00 : f32
    %17 = vector.broadcast %cst_16 : f32 to vector<16x32xf32>
    %18 = arith.maximumf %16, %17 : vector<16x32xf32>
    %c0_17 = arith.constant 0 : index
    %c0_18 = arith.constant 0 : index
    %19 = vector.load %arg8[%c0_17, %c0_18] : memref<32x8xf32, #tpu.memory_space<vmem>>, vector<32x8xf32>
    %c0_19 = arith.constant 0 : index
    %c0_20 = arith.constant 0 : index
    %20 = vector.load %arg9[%c0_19, %c0_20] : memref<1x8xf32, #tpu.memory_space<vmem>>, vector<1x8xf32>
    %cst_21 = arith.constant dense<0.000000e+00> : vector<16x8xf32>
    %21 = tpu.matmul %18, %19, %cst_21 {dimension_numbers = #tpu.dot_dimension_numbers<[1], [0], [0], [1], [0, 0, 1, 1], [], []>} : vector<16x32xf32>, vector<32x8xf32>, vector<16x8xf32> -> vector<16x8xf32>
    %22 = vector.broadcast %20 : vector<1x8xf32> to vector<16x8xf32>
    %23 = arith.addf %21, %22 : vector<16x8xf32>
    %c0_22 = arith.constant 0 : index
    %c0_23 = arith.constant 0 : index
    %24 = vector.load %arg10[%c0_22, %c0_23] : memref<16x8xf32, #tpu.memory_space<vmem>>, vector<16x8xf32>
    tpu.vector_store %arg10[%c0_22, %c0_23], %23 {strides = array<i32>} : memref<16x8xf32, #tpu.memory_space<vmem>>, vector<16x8xf32>,
    return
  }
  func.func @transform_0(%arg0: i32) -> (i32, i32) {
    %c0_i32 = arith.constant 0 : i32
    %c0_i32_0 = arith.constant 0 : i32
    return %arg0, %c0_i32 : i32, i32
  }
  func.func @transform_1(%arg0: i32) -> (i32, i32) {
    %c0_i32 = arith.constant 0 : i32
    %c0_i32_0 = arith.constant 0 : i32
    return %arg0, %c0_i32 : i32, i32
  }
  func.func @transform_2(%arg0: i32) -> (i32, i32) {
    %c0_i32 = arith.constant 0 : i32
    %c0_i32_0 = arith.constant 0 : i32
    %c0_i32_1 = arith.constant 0 : i32
    return %c0_i32, %c0_i32_0 : i32, i32
  }
  func.func @transform_3(%arg0: i32) -> (i32, i32) {
    %c0_i32 = arith.constant 0 : i32
    %c0_i32_0 = arith.constant 0 : i32
    %c0_i32_1 = arith.constant 0 : i32
    return %c0_i32, %c0_i32_0 : i32, i32
  }
  func.func @transform_4(%arg0: i32) -> (i32, i32) {
    %c0_i32 = arith.constant 0 : i32
    %c0_i32_0 = arith.constant 0 : i32
    %c0_i32_1 = arith.constant 0 : i32
    return %c0_i32, %c0_i32_0 : i32, i32
  }
  func.func @transform_5(%arg0: i32) -> (i32, i32) {
    %c0_i32 = arith.constant 0 : i32
    %c0_i32_0 = arith.constant 0 : i32
    %c0_i32_1 = arith.constant 0 : i32
    return %c0_i32, %c0_i32_0 : i32, i32
  }
  func.func @transform_6(%arg0: i32) -> (i32, i32) {
    %c0_i32 = arith.constant 0 : i32
    %c0_i32_0 = arith.constant 0 : i32
    %c0_i32_1 = arith.constant 0 : i32
    return %c0_i32, %c0_i32_0 : i32, i32
  }
  func.func @transform_7(%arg0: i32) -> (i32, i32) {
    %c0_i32 = arith.constant 0 : i32
    %c0_i32_0 = arith.constant 0 : i32
    %c0_i32_1 = arith.constant 0 : i32
    return %c0_i32, %c0_i32_0 : i32, i32
  }
  func.func @transform_8(%arg0: i32) -> (i32, i32) {
    %c0_i32 = arith.constant 0 : i32
    %c0_i32_0 = arith.constant 0 : i32
    %c0_i32_1 = arith.constant 0 : i32
    return %c0_i32, %c0_i32_0 : i32, i32
  }
  func.func @transform_9(%arg0: i32) -> (i32, i32) {
    %c0_i32 = arith.constant 0 : i32
    %c0_i32_0 = arith.constant 0 : i32
    return %arg0, %c0_i32 : i32, i32
  }
}

</mosaic_0001>

<llo_original>
// kernel: tpu_custom_call.1
$region0: #{tpu_custom_call.1}
  #allocation0 [shape = 'u32[]', space=smem, size = 0x4, offset = 0x4, fixed_abs, tag = 'smem constant byte address 0x4 - core index']
  #allocation1 [shape = 'u32[72,128]{1,0:T(1,128)}', space=vmem, size = 0x9000, scoped, tag = 'internal scratch']
  %s0 = inlined_call_operand.hbm [shape: f32[16,16], index: 0, kind: input, shape index: {}]
  %s1 = inlined_call_operand.hbm [shape: f32[16,16], index: 1, kind: input, shape index: {}]
  %s2 = inlined_call_operand.hbm [shape: f32[16,32], index: 2, kind: input, shape index: {}]
  %s3 = inlined_call_operand.hbm [shape: f32[16,32], index: 3, kind: input, shape index: {}]
  %s4 = inlined_call_operand.vmem [shape: f32[1,32], index: 4, kind: input, shape index: {}]
  %s5 = inlined_call_operand.vmem [shape: f32[32,32], index: 5, kind: input, shape index: {}]
  %s6 = inlined_call_operand.vmem [shape: f32[1,32], index: 6, kind: input, shape index: {}]
  %s7 = inlined_call_operand.vmem [shape: f32[32,8], index: 7, kind: input, shape index: {}]
  %s8 = inlined_call_operand.vmem [shape: f32[1,8], index: 8, kind: input, shape index: {}]
  %s9 = inlined_call_operand.vmem [shape: f32[16,8], index: 9, kind: output, shape index: {}]
  %s10 = sld [smem:[#allocation0]]
  $region62: #{tpu_custom_call.1} parent=0
    _
  %s12 = ssub.s32 1, %s10
  %s13 = scalar_select 0, %s12, %s10
  $region1: #{tpu_custom_call.1} parent=0
    #allocation2 [shape = 'u8[8192]{0}', space=vmem, size = 0x2000, scoped, tag = 'input window, operand 0, single buffered']
    #allocation3 [shape = 's32[1]{0}', space=sflag, size = 0x4, scoped, tag = 'scoped memory for tpu_custom_call.1']
    #allocation4 [shape = 'u8[8192]{0}', space=vmem, size = 0x2000, scoped, tag = 'input window, operand 1, single buffered']
    #allocation5 [shape = 's32[1]{0}', space=sflag, size = 0x4, scoped, tag = 'scoped memory for tpu_custom_call.1']
    #allocation6 [shape = 'u8[8192]{0}', space=vmem, size = 0x2000, scoped, tag = 'input window, operand 2, single buffered']
    #allocation7 [shape = 'u8[8192]{0}', space=vmem, size = 0x2000, scoped, tag = 'input window, operand 3, single buffered']
    #allocation8 [shape = 's32[1]{0}', space=sflag, size = 0x4, scoped, tag = 'scoped memory for tpu_custom_call.1']
    %14 = vsyncpa [#allocation3], 0
    %15 = vsyncpa [#allocation5], 0
    %16 = vsyncpa [#allocation8], 0
    // Predicated region
    $region2: #{tpu_custom_call.1} parent=1 // pred_check
      _
    $region3: #{tpu_custom_call.1} parent=1 // pred_check_branch
      %18 = sbr.rel (0) target = $region5
    $region4: #{tpu_custom_call.1} parent=1 // pred_region
      %20 = vsyncadd [#allocation3], 0
      %s21 = sshll.u32 %s0, 4
      %s22 = int_to_ptr.hbm [resolvable:$true] %s21
      %s23 = sshll.u32 [#allocation2], 4
      %s24 = int_to_ptr.vmem [resolvable:$true] %s23
      %29 = dma.hbm_to_vmem [thread:$0]  %s22, 256, %s24, [#allocation3], 128, 128, 8
    $region5: #{tpu_custom_call.1} parent=1 // pred_fallthru
      _
    // Predicated region
    $region6: #{tpu_custom_call.1} parent=1 // pred_check
      _
    $region7: #{tpu_custom_call.1} parent=1 // pred_check_branch
      %31 = sbr.rel (0) target = $region9
    $region8: #{tpu_custom_call.1} parent=1 // pred_region
      %33 = vsyncadd [#allocation5], 0
      %s34 = sshll.u32 %s1, 4
      %s35 = int_to_ptr.hbm [resolvable:$true] %s34
      %s36 = sshll.u32 [#allocation4], 4
      %s37 = int_to_ptr.vmem [resolvable:$true] %s36
      %42 = dma.hbm_to_vmem [thread:$0]  %s35, 256, %s37, [#allocation5], 128, 128, 8
    $region9: #{tpu_custom_call.1} parent=1 // pred_fallthru
      _
    // Predicated region
    $region10: #{tpu_custom_call.1} parent=1 // pred_check
      _
    $region11: #{tpu_custom_call.1} parent=1 // pred_check_branch
      %44 = sbr.rel (0) target = $region13
    $region12: #{tpu_custom_call.1} parent=1 // pred_region
      %46 = vsyncadd [#allocation5], 0
      %s47 = sshll.u32 %s2, 4
      %s48 = int_to_ptr.hbm [resolvable:$true] %s47
      %s49 = sshll.u32 [#allocation6], 4
      %s50 = int_to_ptr.vmem [resolvable:$true] %s49
      %55 = dma.hbm_to_vmem [thread:$0]  %s48, 256, %s50, [#allocation5], 128, 128, 8
    $region13: #{tpu_custom_call.1} parent=1 // pred_fallthru
      _
    // Predicated region
    $region14: #{tpu_custom_call.1} parent=1 // pred_check
      _
    $region15: #{tpu_custom_call.1} parent=1 // pred_check_branch
      %57 = sbr.rel (0) target = $region17
    $region16: #{tpu_custom_call.1} parent=1 // pred_region
      %59 = vsyncadd [#allocation8], 0
      %s60 = sshll.u32 %s3, 4
      %s61 = int_to_ptr.hbm [resolvable:$true] %s60
      %s62 = sshll.u32 [#allocation7], 4
      %s63 = int_to_ptr.vmem [resolvable:$true] %s62
      %68 = dma.hbm_to_vmem [thread:$0]  %s61, 256, %s63, [#allocation8], 128, 128, 8
    $region17: #{tpu_custom_call.1} parent=1 // pred_fallthru
      _
    // Predicated region
    $region18: #{tpu_custom_call.1} parent=1 // pred_check
      _
    $region19: #{tpu_custom_call.1} parent=1 // pred_check_branch
      %70 = sbr.rel (0) target = $region21
    $region20: #{tpu_custom_call.1} parent=1 // pred_region
      _
    $region21: #{tpu_custom_call.1} parent=1 // pred_fallthru
      _
    // Predicated region
    $region22: #{tpu_custom_call.1} parent=1 // pred_check
      _
    $region23: #{tpu_custom_call.1} parent=1 // pred_check_branch
      %72 = sbr.rel (0) target = $region25
    $region24: #{tpu_custom_call.1} parent=1 // pred_region
      _
    $region25: #{tpu_custom_call.1} parent=1 // pred_fallthru
      _
    // Predicated region
    $region26: #{tpu_custom_call.1} parent=1 // pred_check
      _
    $region27: #{tpu_custom_call.1} parent=1 // pred_check_branch
      %74 = sbr.rel (0) target = $region29
    $region28: #{tpu_custom_call.1} parent=1 // pred_region
      _
    $region29: #{tpu_custom_call.1} parent=1 // pred_fallthru
      _
    // Predicated region
    $region30: #{tpu_custom_call.1} parent=1 // pred_check
      _
    $region31: #{tpu_custom_call.1} parent=1 // pred_check_branch
      %76 = sbr.rel (0) target = $region33
    $region32: #{tpu_custom_call.1} parent=1 // pred_region
      _
    $region33: #{tpu_custom_call.1} parent=1 // pred_fallthru
      _
    // Predicated region
    $region34: #{tpu_custom_call.1} parent=1 // pred_check
      _
    $region35: #{tpu_custom_call.1} parent=1 // pred_check_branch
      %78 = sbr.rel (0) target = $region37
    $region36: #{tpu_custom_call.1} parent=1 // pred_region
      _
    $region37: #{tpu_custom_call.1} parent=1 // pred_fallthru
      _
    // Predicated region
    $region38: #{tpu_custom_call.1} parent=1 // pred_check
      _
    $region39: #{tpu_custom_call.1} parent=1 // pred_check_branch
      %80 = sbr.rel (0) target = $region41
    $region40: #{tpu_custom_call.1} parent=1 // pred_region
      %82 = dma.done [#allocation3], 256
    $region41: #{tpu_custom_call.1} parent=1 // pred_fallthru
      _
    // Predicated region
    $region42: #{tpu_custom_call.1} parent=1 // pred_check
      _
    $region43: #{tpu_custom_call.1} parent=1 // pred_check_branch
      %84 = sbr.rel (0) target = $region45
    $region44: #{tpu_custom_call.1} parent=1 // pred_region
      %86 = dma.done [#allocation5], 256
    $region45: #{tpu_custom_call.1} parent=1 // pred_fallthru
      _
    // Predicated region
    $region46: #{tpu_custom_call.1} parent=1 // pred_check
      _
    $region47: #{tpu_custom_call.1} parent=1 // pred_check_branch
      %88 = sbr.rel (0) target = $region49
    $region48: #{tpu_custom_call.1} parent=1 // pred_region
      %90 = dma.done [#allocation5], 256
    $region49: #{tpu_custom_call.1} parent=1 // pred_fallthru
      _
    // Predicated region
    $region50: #{tpu_custom_call.1} parent=1 // pred_check
      _
    $region51: #{tpu_custom_call.1} parent=1 // pred_check_branch
      %92 = sbr.rel (0) target = $region53
    $region52: #{tpu_custom_call.1} parent=1 // pred_region
      %94 = dma.done [#allocation8], 256
    $region53: #{tpu_custom_call.1} parent=1 // pred_fallthru
      _
    %v95 = vld [vmem:[#allocation2] sm:$0xff]
    %v96 = vld [vmem:[#allocation2 + $0x8] sm:$0xff]
    %v97 = vld [vmem:[#allocation6] sm:$0xff]
    %v98 = vld [vmem:[#allocation6 + $0x8] sm:$0xff]
    %v99 = vld [vmem:[#allocation4] sm:$0xff]
    %v100 = vld [vmem:[#allocation4 + $0x8] sm:$0xff]
    %v101 = vld [vmem:[#allocation7] sm:$0xff]
    %v102 = vld [vmem:[#allocation7 + $0x8] sm:$0xff]
    %vm103 = vcmask 130048
    %v105 = vsel %vm103, %v99, 0
    %v108 = vsel %vm103, %v100, 0
    %110 = vmatpush.msra.mxu0 0.0
    %111 = vmatpush.msra.mxu0 0.0
    %112 = vmatpush.msra.mxu0 0.0
    %113 = vmatpush.msra.mxu0 0.0
    %114 = vmatpush.msra.mxu0 0.0
    %115 = vmatpush.msra.mxu0 0.0
    %116 = vmatpush.msra.mxu0 0.0
    %117 = vmatpush.msra.mxu0 0.0
    %118 = vmatpush.msra.mxu0 0.0
    %119 = vmatpush.msra.mxu0 0.0
    %120 = vmatpush.msra.mxu0 0.0
    %121 = vmatpush.msra.mxu0 0.0
    %122 = vmatpush.msra.mxu0 0.0
    %123 = vmatpush.msra.mxu0 0.0
    %124 = vmatpush.msra.mxu0 %v102
    %125 = vmatpush.msra.mxu0 %v101
    %126 = vmatmul.f32.gmra.mxu0 %v105
    %v127 = vpop.f32.mrf.mxu0
    %v128 = vadd.f32 0.0, %v127
    %129 = vmatmul.f32.gmra.mxu0 %v108
    %v130 = vpop.f32.mrf.mxu0
    %v131 = vadd.f32 0.0, %v130
    %132 = vdwg.mxu0
    %v134 = vsel %vm103, %v95, 0
    %v137 = vsel %vm103, %v96, 0
    %139 = vmatpush.msra.mxu0 0.0
    %140 = vmatpush.msra.mxu0 0.0
    %141 = vmatpush.msra.mxu0 0.0
    %142 = vmatpush.msra.mxu0 0.0
    %143 = vmatpush.msra.mxu0 0.0
    %144 = vmatpush.msra.mxu0 0.0
    %145 = vmatpush.msra.mxu0 0.0
    %146 = vmatpush.msra.mxu0 0.0
    %147 = vmatpush.msra.mxu0 0.0
    %148 = vmatpush.msra.mxu0 0.0
    %149 = vmatpush.msra.mxu0 0.0
    %150 = vmatpush.msra.mxu0 0.0
    %151 = vmatpush.msra.mxu0 0.0
    %152 = vmatpush.msra.mxu0 0.0
    %153 = vmatpush.msra.mxu0 %v98
    %154 = vmatpush.msra.mxu0 %v97
    %155 = vmatmul.f32.gmra.mxu0 %v134
    %v156 = vpop.f32.mrf.mxu0
    %v157 = vadd.f32 %v128, %v156
    %158 = vmatmul.f32.gmra.mxu0 %v137
    %v159 = vpop.f32.mrf.mxu0
    %v160 = vadd.f32 %v131, %v159
    %161 = vdwg.mxu0
    %v162 = vld [vmem:[%s4] sm:$0x1]
    %v164 = vperm.slane %v162, 0
    %v166 = vadd.f32 %v157, %v164
    %v167 = vadd.f32 %v160, %v164
    %v168 = vmax.f32 %v166, 0.0
    %v169 = vmax.f32 %v167, 0.0
    %v170 = vld [vmem:[%s5] sm:$0xff]
    %v171 = vld [vmem:[%s5 + $0x8] sm:$0xff]
    %v172 = vld [vmem:[%s5 + $0x10] sm:$0xff]
    %v173 = vld [vmem:[%s5 + $0x18] sm:$0xff]
    %v174 = vld [vmem:[%s6] sm:$0x1]
    %v176 = vperm.slane %v174, 0
    %vm178 = vcmask 261120
    %v180 = vsel %vm178, %v168, 0
    %v183 = vsel %vm178, %v169, 0
    %185 = vmatpush.msra.mxu0 0.0
    %186 = vmatpush.msra.mxu0 0.0
    %187 = vmatpush.msra.mxu0 0.0
    %188 = vmatpush.msra.mxu0 0.0
    %189 = vmatpush.msra.mxu0 0.0
    %190 = vmatpush.msra.mxu0 0.0
    %191 = vmatpush.msra.mxu0 0.0
    %192 = vmatpush.msra.mxu0 0.0
    %193 = vmatpush.msra.mxu0 0.0
    %194 = vmatpush.msra.mxu0 0.0
    %195 = vmatpush.msra.mxu0 0.0
    %196 = vmatpush.msra.mxu0 0.0
    %197 = vmatpush.msra.mxu0 %v173
    %198 = vmatpush.msra.mxu0 %v172
    %199 = vmatpush.msra.mxu0 %v171
    %200 = vmatpush.msra.mxu0 %v170
    %201 = vmatmul.f32.gmra.mxu0 %v180
    %v202 = vpop.f32.mrf.mxu0
    %v203 = vadd.f32 %v176, %v202
    %204 = vmatmul.f32.gmra.mxu0 %v183
    %v205 = vpop.f32.mrf.mxu0
    %v206 = vadd.f32 %v176, %v205
    %207 = vdwg.mxu0
    %v208 = vmax.f32 %v203, 0.0
    %v209 = vmax.f32 %v206, 0.0
    %v210 = vld [vmem:[%s7] sm:$0xff]
    %v211 = vld [vmem:[%s7 + $0x8] sm:$0xff]
    %v212 = vld [vmem:[%s7 + $0x10] sm:$0xff]
    %v213 = vld [vmem:[%s7 + $0x18] sm:$0xff]
    %v214 = vld [vmem:[%s8] sm:$0x1]
    %v216 = vperm.slane %v214, 0
    %v219 = vsel %vm178, %v208, 0
    %v222 = vsel %vm178, %v209, 0
    %224 = vmatpush.msra.mxu0 0.0
    %225 = vmatpush.msra.mxu0 0.0
    %226 = vmatpush.msra.mxu0 0.0
    %227 = vmatpush.msra.mxu0 0.0
    %228 = vmatpush.msra.mxu0 0.0
    %229 = vmatpush.msra.mxu0 0.0
    %230 = vmatpush.msra.mxu0 0.0
    %231 = vmatpush.msra.mxu0 0.0
    %232 = vmatpush.msra.mxu0 0.0
    %233 = vmatpush.msra.mxu0 0.0
    %234 = vmatpush.msra.mxu0 0.0
    %235 = vmatpush.msra.mxu0 0.0
    %236 = vmatpush.msra.mxu0 %v213
    %237 = vmatpush.msra.mxu0 %v212
    %238 = vmatpush.msra.mxu0 %v211
    %239 = vmatpush.msra.mxu0 %v210
    %240 = vmatmul.f32.gmra.mxu0 %v219
    %v241 = vpop.f32.mrf.mxu0
    %v242 = vadd.f32 %v216, %v241
    %243 = vmatmul.f32.gmra.mxu0 %v222
    %v244 = vpop.f32.mrf.mxu0
    %v245 = vadd.f32 %v216, %v244
    %246 = vdwg.mxu0
    %vm247 = vcmask 64512
    %248 = vst.msk [vmem:[%s9] sm:$0xff] %vm247, %v242
    %249 = vst.msk [vmem:[%s9 + $0x8] sm:$0xff] %vm247, %v245
    // Predicated region
    $region54: #{tpu_custom_call.1} parent=1 // pred_check
      _
    $region55: #{tpu_custom_call.1} parent=1 // pred_check_branch
      %251 = sbr.rel (0) target = $region57
    $region56: #{tpu_custom_call.1} parent=1 // pred_region
      _
    $region57: #{tpu_custom_call.1} parent=1 // pred_fallthru
      _
    // Predicated region
    $region58: #{tpu_custom_call.1} parent=1 // pred_check
      _
    $region59: #{tpu_custom_call.1} parent=1 // pred_check_branch
      %253 = sbr.rel (0) target = $region61
    $region60: #{tpu_custom_call.1} parent=1 // pred_region
      _
    $region61: #{tpu_custom_call.1} parent=1 // pred_fallthru
      _
    %254 = vsyncpa [#allocation3], 1
    %255 = vsyncpa [#allocation5], 1
    %256 = vsyncpa [#allocation8], 1

</llo_original>
